<compile_context>
chip_gen: v6e
topology: v6e:2x2x1
jax: 0.10.0
libtpu: 0.0.40
codegen_flags: <defaults>
</compile_context>

<pallas_src>
import functools
import math

import jax
import jax.numpy as jnp
from jax.experimental import pallas as pl
from jax.experimental.pallas import tpu as pltpu

_MASK_FILL = -10000.0  # Megatron/oslo convention for masked-fill value


# ----------------------------------------------------------------------------
# Kernel
# ----------------------------------------------------------------------------
def _fused_scale_mask_softmax_kernel(x_ref, *rest, scale, softmax_in_fp32,
                                     n_masks):
    # x_ref:      (1, TH, TQ, Sk) tile of attention scores
    # mask_refs:  0..2 additive-bias tiles, broadcastable against x
    mask_refs = rest[:n_masks]
    o_ref = rest[n_masks]

    x = x_ref[...]
    if softmax_in_fp32:
        x = x.astype(jnp.float32)

    x = x * jnp.asarray(scale, x.dtype)

    # All masking is additive bias (causal fill folded into a precomputed
    # bias): one add per mask operand, no per-element compare/select.
    for m_ref in mask_refs:
        x = x + m_ref[...].astype(x.dtype)

    # numerically-stable softmax over the key (lane) axis
    m = jnp.max(x, axis=-1, keepdims=True)
    e = jnp.exp(x - m)
    s = jnp.sum(e, axis=-1, keepdims=True)
    out = e * pl.reciprocal(s, approx=True)

    o_ref[...] = out.astype(o_ref.dtype)


# ----------------------------------------------------------------------------
# Generation-aware tiling / VMEM helpers
# ----------------------------------------------------------------------------
def _tpu_mem_profile():
    """Returns (target_block_bytes, vmem_limit_ceiling_bytes)."""
    vmem_cap = 128 * 2**20
    kind = ""
    try:
        kind = (getattr(jax.devices()[0], "device_kind", "") or "").lower()
    except Exception:
        pass
    try:
        vmem_cap = int(pltpu.get_tpu_info().vmem_capacity_bytes)
    except Exception:
        pass
    if vmem_cap <= 64 * 2**20:
        # v7x: 64 MiB VMEM per TensorCore -> smaller blocks, tighter ceiling
        return 2 * 2**20, 44 * 2**20
    if "v5" in kind:
        # v5e: single vst slot / f32-only VPU -> keep fp32 working set modest
        return 2 * 2**20, 48 * 2**20
    # v6e / unknown
    return 4 * 2**20, 56 * 2**20


def _largest_divisor_leq(n, cap):
    cap = max(1, min(n, cap))
    for d in range(cap, 0, -1):
        if n % d == 0:
            return d
    return 1


def _pick_q_tile(sq, sk, itemsize, target_bytes):
    """Largest sublane-aligned divisor of Sq whose (q_tile, Sk) slab is within
    the byte target (or the full query axis if it already fits)."""
    sub = 16 if itemsize < 4 else 8
    row_bytes = max(1, sk * itemsize)
    max_q = max(1, target_bytes // row_bytes)
    if sq <= max_q:
        return sq
    t = (max_q // sub) * sub
    while t >= sub:
        if sq % t == 0:
            return t
        t -= sub
    t = (max_q // 8) * 8
    while t >= 8:
        if sq % t == 0:
            return t
        t -= 8
    return sq  # fallback: whole query axis in one block


def _pick_head_fold(h, q_tile, sq, row_bytes, target_bytes):
    """Fold heads into the block whenever the per-head slab is small, to hit a
    multi-MiB block (amortizes ~0.35us grid-step overhead and DMA setup)."""
    if q_tile != sq:
        return 1
    per_head = max(1, q_tile * row_bytes)
    want = max(1, target_bytes // per_head)
    return _largest_divisor_leq(h, want)


# ----------------------------------------------------------------------------
# Wrapper
# ----------------------------------------------------------------------------
def fused_scale_mask_softmax(x, scale, use_triang_mask,
                             softmax_in_fp32=True, pad_mask=None):
    """x: (B, H, Sq, Sk). pad_mask: additive mask broadcastable to
    (B, 1, 1, Sk) or (B, 1, Sq, Sk), or None."""
    B, H, Sq, Sk = x.shape
    itemsize = jnp.dtype(x.dtype).itemsize
    mask_dtype = x.dtype  # bf16 masks for bf16 scores: half the HBM bytes
    mask_itemsize = jnp.dtype(mask_dtype).itemsize

    target_blk_bytes, vmem_ceiling = _tpu_mem_profile()

    # ---- tiling -------------------------------------------------------------
    q_tile = _pick_q_tile(Sq, Sk, itemsize, target_blk_bytes)
    th = _pick_head_fold(H, q_tile, Sq, Sk * itemsize, target_blk_bytes)
    # Head axis innermost so mask blocks are reused across heads.
    grid = (B, Sq // q_tile, H // th)

    # ---- pad mask normalization --------------------------------------------
    pm = None
    per_query_pad = False
    if pad_mask is not None:
        pm = jnp.asarray(pad_mask)
        if pm.ndim < 4:
            pm = pm.reshape((1,) * (4 - pm.ndim) + pm.shape)
        if pm.shape[-2] not in (1, Sq):
            raise ValueError(
                f"pad_mask query dim must be 1 or Sq={Sq}, got {pm.shape}")
        per_query_pad = pm.shape[-2] == Sq
        mq = Sq if per_query_pad else 1
        pm = jnp.broadcast_to(pm, (B, 1, mq, Sk)).astype(mask_dtype)

    # ---- causal mask as a precomputed additive bias ------------------------
    causal = None
    if use_triang_mask:
        row = jax.lax.broadcasted_iota(jnp.int32, (Sq, Sk), 0)
        col = jax.lax.broadcasted_iota(jnp.int32, (Sq, Sk), 1)
        causal = jnp.where(col > row, _MASK_FILL, 0.0).astype(mask_dtype)
        causal = causal.reshape(1, 1, Sq, Sk)

    # If the pad mask is per-query it has the same shape/access pattern as the
    # causal bias -> fold them into a single additive mask (one add in-kernel).
    if causal is not None and pm is not None and per_query_pad:
        pm = (pm.astype(jnp.float32) + causal.astype(jnp.float32)).astype(mask_dtype)
        causal = None

    operands = [x]
    in_specs = [pl.BlockSpec((1, th, q_tile, Sk), lambda b, q, h: (b, h, q, 0))]
    mask_blk_bytes = 0

    if causal is not None:
        operands.append(causal)
        in_specs.append(
            pl.BlockSpec((1, 1, q_tile, Sk), lambda b, q, h: (0, 0, q, 0)))
        mask_blk_bytes += q_tile * Sk * mask_itemsize
    if pm is not None:
        if per_query_pad:
            operands.append(pm)
            in_specs.append(
                pl.BlockSpec((1, 1, q_tile, Sk), lambda b, q, h: (b, 0, q, 0)))
            mask_blk_bytes += q_tile * Sk * mask_itemsize
        else:
            operands.append(pm)
            in_specs.append(
                pl.BlockSpec((1, 1, 1, Sk), lambda b, q, h: (b, 0, 0, 0)))
            mask_blk_bytes += Sk * mask_itemsize

    n_masks = len(operands) - 1

    # ---- VMEM budget: double-buffered in/out + mask buffers + fp32 temps ---
    x_blk_bytes = th * q_tile * Sk * itemsize
    fp32_blk_bytes = th * q_tile * Sk * 4
    est = 2 * (2 * x_blk_bytes + mask_blk_bytes) + 4 * fp32_blk_bytes
    vmem_limit = int(min(vmem_ceiling, max(32 * 2**20, 2 * est)))

    kernel = functools.partial(
        _fused_scale_mask_softmax_kernel,
        scale=float(scale),
        softmax_in_fp32=bool(softmax_in_fp32),
        n_masks=n_masks,
    )

    out = pl.pallas_call(
        kernel,
        out_shape=jax.ShapeDtypeStruct((B, H, Sq, Sk), x.dtype),
        grid=grid,
        in_specs=in_specs,
        out_specs=pl.BlockSpec((1, th, q_tile, Sk),
                               lambda b, q, h: (b, h, q, 0)),
        compiler_params=pltpu.CompilerParams(
            dimension_semantics=("parallel", "parallel", "parallel"),
            vmem_limit_bytes=vmem_limit,
        ),
    )(*operands)

    return out


class FusedScaleMaskSoftmax:
    """JAX/Pallas mirror of oslo's FusedScaleMaskSoftmax module."""

    def __init__(self, scale, use_triang_mask, softmax_in_fp32=True, pad_mask=None):
        self.scale = scale
        self.use_triang_mask = use_triang_mask
        self.softmax_in_fp32 = softmax_in_fp32
        self.pad_mask = pad_mask

    def __call__(self, x):
        return fused_scale_mask_softmax(x, self.scale, self.use_triang_mask,
                                        self.softmax_in_fp32, self.pad_mask)


# ----------------------------------------------------------------------------
# Reference + test
# ----------------------------------------------------------------------------
def _reference(x, scale, use_triang_mask, softmax_in_fp32, pad_mask):
    orig_dtype = x.dtype
    xf = x.astype(jnp.float32) if softmax_in_fp32 else x
    xf = xf * scale
    _, _, Sq, Sk = x.shape
    if use_triang_mask:
        row = jnp.arange(Sq)[:, None]
        col = jnp.arange(Sk)[None, :]
        xf = jnp.where(col > row, _MASK_FILL, xf)
    if pad_mask is not None:
        xf = xf + jnp.asarray(pad_mask).astype(xf.dtype)
    out = jax.nn.softmax(xf, axis=-1)
    return out.astype(orig_dtype)


if __name__ == "__main__":
    key = jax.random.PRNGKey(0)
    B, H, Sq, Sk, hidden = 2, 4, 16, 16, 32

    scores = jax.random.normal(key, (B, H, Sq, Sk), dtype=jnp.float32) * 3.0
    scores = scores.astype(jnp.bfloat16)
    scale = 1.0 / math.sqrt(hidden)

    def check(out, ref):
        assert out.shape == ref.shape and out.dtype == ref.dtype
        assert jnp.allclose(out.astype(jnp.float32), ref.astype(jnp.float32),
                            atol=2e-2, rtol=2e-2)

    # 1) causal + per-key pad mask (last 4 keys of batch 1 padded)
    key_idx = jnp.arange(Sk)[None, None, None, :]
    valid_len = jnp.array([Sk, Sk - 4]).reshape(B, 1, 1, 1)
    pad_key = jnp.where(key_idx >= valid_len, _MASK_FILL, 0.0).astype(jnp.float32)

    m1 = FusedScaleMaskSoftmax(scale=scale, use_triang_mask=True,
                               softmax_in_fp32=True, pad_mask=pad_key)
    out1 = jax.block_until_ready(m1(scores))
    check(out1, _reference(scores, scale, True, True, pad_key))

    # 2) causal, no pad mask (mask operand count = 1)
    m2 = FusedScaleMaskSoftmax(scale=scale, use_triang_mask=True,
                               softmax_in_fp32=True, pad_mask=None)
    out2 = jax.block_until_ready(m2(scores))
    check(out2, _reference(scores, scale, True, True, None))

    # 3) causal + per-query pad mask (exercises the fold-into-one-mask path)
    q_idx = jnp.arange(Sq)[None, None, :, None]
    pad_q = jnp.where((key_idx >= Sk - 4) & (q_idx >= Sq // 2), _MASK_FILL, 0.0)
    pad_q = jnp.broadcast_to(pad_q, (B, 1, Sq, Sk)).astype(jnp.float32)

    m3 = FusedScaleMaskSoftmax(scale=scale, use_triang_mask=True,
                               softmax_in_fp32=True, pad_mask=pad_q)
    out3 = jax.block_until_ready(m3(scores))
    check(out3, _reference(scores, scale, True, True, pad_q))

    print("KERNEL_OK")
</pallas_src>

<mosaic_0001>
module attributes {stable_mosaic.version = 11 : i64} {
  func.func @_fused_scale_mask_softmax_kernel(%arg0: i32, %arg1: i32, %arg2: i32, %arg3: memref<1x4x16x16xbf16, #tpu.memory_space<vmem>>, %arg4: memref<1x1x16x16xbf16, #tpu.memory_space<vmem>>, %arg5: memref<1x1x1x16xbf16, #tpu.memory_space<vmem>>, %arg6: memref<1x4x16x16xbf16, #tpu.memory_space<vmem>>) attributes {dimension_semantics = [#tpu.dimension_semantics<parallel>, #tpu.dimension_semantics<parallel>, #tpu.dimension_semantics<parallel>], iteration_bounds = array<i64: 2, 1, 1>, scalar_prefetch = 0 : i64, scratch_operands = 0 : i64, tpu.core_type = #tpu.core_type<tc>, window_params = [{transform_indices = @transform_0, window_bounds = array<i64: 1, 4, 16, 16>}, {transform_indices = @transform_1, window_bounds = array<i64: 1, 1, 16, 16>}, {transform_indices = @transform_2, window_bounds = array<i64: 1, 1, 1, 16>}, {transform_indices = @transform_3, window_bounds = array<i64: 1, 4, 16, 16>}]} {
    %c0 = arith.constant 0 : index
    %c0_0 = arith.constant 0 : index
    %c0_1 = arith.constant 0 : index
    %c0_2 = arith.constant 0 : index
    %0 = vector.load %arg3[%c0, %c0_0, %c0_1, %c0_2] : memref<1x4x16x16xbf16, #tpu.memory_space<vmem>>, vector<1x4x16x16xbf16>
    %1 = arith.extf %0 : vector<1x4x16x16xbf16> to vector<1x4x16x16xf32>
    %cst = arith.constant 0.176776692 : f32
    %2 = vector.broadcast %cst : f32 to vector<1x4x16x16xf32>
    %3 = arith.mulf %1, %2 : vector<1x4x16x16xf32>
    %c0_3 = arith.constant 0 : index
    %c0_4 = arith.constant 0 : index
    %c0_5 = arith.constant 0 : index
    %c0_6 = arith.constant 0 : index
    %4 = vector.load %arg4[%c0_3, %c0_4, %c0_5, %c0_6] : memref<1x1x16x16xbf16, #tpu.memory_space<vmem>>, vector<1x1x16x16xbf16>
    %5 = arith.extf %4 : vector<1x1x16x16xbf16> to vector<1x1x16x16xf32>
    %6 = vector.broadcast %5 : vector<1x1x16x16xf32> to vector<1x4x16x16xf32>
    %7 = arith.addf %3, %6 : vector<1x4x16x16xf32>
    %c0_7 = arith.constant 0 : index
    %c0_8 = arith.constant 0 : index
    %c0_9 = arith.constant 0 : index
    %c0_10 = arith.constant 0 : index
    %8 = vector.load %arg5[%c0_7, %c0_8, %c0_9, %c0_10] : memref<1x1x1x16xbf16, #tpu.memory_space<vmem>>, vector<1x1x1x16xbf16>
    %9 = arith.extf %8 : vector<1x1x1x16xbf16> to vector<1x1x1x16xf32>
    %10 = vector.broadcast %9 : vector<1x1x1x16xf32> to vector<1x4x16x16xf32>
    %11 = arith.addf %7, %10 : vector<1x4x16x16xf32>
    %cst_11 = arith.constant dense<0xFF800000> : vector<1x4x16xf32>
    %12 = vector.multi_reduction <maximumf>, %11, %cst_11 [3] : vector<1x4x16x16xf32> to vector<1x4x16xf32>
    %13 = vector.shape_cast %12 : vector<1x4x16xf32> to vector<1x4x16x1xf32>
    %14 = vector.broadcast %13 : vector<1x4x16x1xf32> to vector<1x4x16x16xf32>
    %15 = arith.subf %11, %14 : vector<1x4x16x16xf32>
    %16 = math.exp %15 : vector<1x4x16x16xf32>
    %cst_12 = arith.constant dense<0.000000e+00> : vector<1x4x16xf32>
    %17 = vector.multi_reduction <add>, %16, %cst_12 [3] : vector<1x4x16x16xf32> to vector<1x4x16xf32>
    %18 = vector.shape_cast %17 : vector<1x4x16xf32> to vector<1x4x16x1xf32>
    %19 = tpu.reciprocal %18 {approx = true} : vector<1x4x16x1xf32> -> vector<1x4x16x1xf32>
    %20 = vector.broadcast %19 : vector<1x4x16x1xf32> to vector<1x4x16x16xf32>
    %21 = arith.mulf %16, %20 : vector<1x4x16x16xf32>
    %22 = arith.truncf %21 : vector<1x4x16x16xf32> to vector<1x4x16x16xbf16>
    %c0_13 = arith.constant 0 : index
    %c0_14 = arith.constant 0 : index
    %c0_15 = arith.constant 0 : index
    %c0_16 = arith.constant 0 : index
    %23 = vector.load %arg6[%c0_13, %c0_14, %c0_15, %c0_16] : memref<1x4x16x16xbf16, #tpu.memory_space<vmem>>, vector<1x4x16x16xbf16>
    tpu.vector_store %arg6[%c0_13, %c0_14, %c0_15, %c0_16], %22 {strides = array<i32>} : memref<1x4x16x16xbf16, #tpu.memory_space<vmem>>, vector<1x4x16x16xbf16>,
    return
  }
  func.func @transform_0(%arg0: i32, %arg1: i32, %arg2: i32) -> (i32, i32, i32, i32) {
    %c0_i32 = arith.constant 0 : i32
    %c0_i32_0 = arith.constant 0 : i32
    return %arg0, %arg2, %arg1, %c0_i32 : i32, i32, i32, i32
  }
  func.func @transform_1(%arg0: i32, %arg1: i32, %arg2: i32) -> (i32, i32, i32, i32) {
    %c0_i32 = arith.constant 0 : i32
    %c0_i32_0 = arith.constant 0 : i32
    %c0_i32_1 = arith.constant 0 : i32
    %c0_i32_2 = arith.constant 0 : i32
    return %c0_i32, %c0_i32_0, %arg1, %c0_i32_1 : i32, i32, i32, i32
  }
  func.func @transform_2(%arg0: i32, %arg1: i32, %arg2: i32) -> (i32, i32, i32, i32) {
    %c0_i32 = arith.constant 0 : i32
    %c0_i32_0 = arith.constant 0 : i32
    %c0_i32_1 = arith.constant 0 : i32
    %c0_i32_2 = arith.constant 0 : i32
    return %arg0, %c0_i32, %c0_i32_0, %c0_i32_1 : i32, i32, i32, i32
  }
  func.func @transform_3(%arg0: i32, %arg1: i32, %arg2: i32) -> (i32, i32, i32, i32) {
    %c0_i32 = arith.constant 0 : i32
    %c0_i32_0 = arith.constant 0 : i32
    return %arg0, %arg2, %arg1, %c0_i32 : i32, i32, i32, i32
  }
}

</mosaic_0001>

<llo_original>
// kernel: tpu_custom_call.1
$region0: #{tpu_custom_call.1}
  #allocation0 [shape = 'u32[]', space=smem, size = 0x4, offset = 0x4, fixed_abs, tag = 'smem constant byte address 0x4 - core index']
  #allocation1 [shape = 'u32[144,128]{1,0:T(1,128)}', space=vmem, size = 0x12000, scoped, tag = 'internal scratch']
  %s0 = inlined_call_operand.hbm [shape: bf16[2,4,16,16], index: 0, kind: input, shape index: {}]
  %s1 = inlined_call_operand.hbm [shape: bf16[1,1,16,16], index: 1, kind: input, shape index: {}]
  %s2 = inlined_call_operand.vmem [shape: bf16[2,1,1,16], index: 2, kind: input, shape index: {}]
  %s3 = inlined_call_operand.hbm [shape: bf16[2,4,16,16], index: 3, kind: output, shape index: {}]
  %s4 = sld [smem:[#allocation0]]
  $region53: #{tpu_custom_call.1} parent=0
    _
  %s6 = ssub.s32 1, %s4
  %s7 = scalar_select 0, %s6, %s4
  $region1: #{tpu_custom_call.1} parent=0
    #allocation2 [shape = 'u8[32768]{0}', space=vmem, size = 0x8000, scoped, tag = 'input window, operand 0']
    #allocation3 [shape = 's32[2]{0}', space=sflag, size = 0x8, scoped, tag = 'scoped memory for tpu_custom_call.1']
    #allocation4 [shape = 's32[2]{0}', space=sflag, size = 0x8, scoped, tag = 'scoped memory for tpu_custom_call.1']
    #allocation5 [shape = 'u8[4096]{0}', space=vmem, size = 0x1000, scoped, tag = 'input window, operand 1, single buffered']
    #allocation6 [shape = 's32[1]{0}', space=sflag, size = 0x4, scoped, tag = 'scoped memory for tpu_custom_call.1']
    #allocation7 [shape = 'u8[32768]{0}', space=vmem, size = 0x8000, scoped, tag = 'output window, operand 0']
    %8 = vsyncpa [#allocation3], 0
    %s9 = scalar_lea.sflag [#allocation3], 1
    %10 = vsyncpa %s9, 0
    %11 = vsyncpa [#allocation6], 0
    %12 = vsyncpa [#allocation4], 0
    %s13 = scalar_lea.sflag [#allocation4], 1
    %14 = vsyncpa %s13, 0
    loop: start=0, step=1, limit=4
    $region2: #{tpu_custom_call.1} parent=1 // loop_pre_header
      _
    $region3: #{tpu_custom_call.1} parent=1 // loop_header
      %s16 = sphi 0, %s20
      %p17 = scmp.ge.s32.totalorder %s16, 4
      %s23 = sphi 0, %s42
      %s24 = sphi 0, %s38
      %s25 = sphi 0, %s34
      %s26 = sphi 0, %s23
      %s27 = sphi 0, %s24
      %s28 = sphi 0, %s25
      %s29 = sphi 0, %s26
      %s30 = sphi 0, %s27
      %s31 = sphi 0, %s28
      %s49 = sphi 0, %s51
      %s52 = sphi 0, %s49
      %s53 = sphi 0, %s52
      %s69 = sphi 0, %s53
      %s75 = sphi 0, %s77
      %s78 = sphi 0, %s75
      %s79 = sphi 0, %s78
      %s95 = sphi 0, %s79
      %s101 = sphi 0, %s103
      %s104 = sphi 0, %s101
      %s105 = sphi 0, %s104
      %s121 = sphi 0, %s105
      %s131 = sphi 0, %s133
      %s134 = sphi 0, %s131
      %s135 = sphi 0, %s134
      %s151 = sphi 0, %s135
    $region4: #{tpu_custom_call.1} parent=1 // loop_header_branch
      %19 = sbr.rel (%p17) target = $region8
    $region5: #{tpu_custom_call.1} parent=1 // loop_body
      %s21 = ssub.s32 %s16, 1
      %s22 = ssub.s32 %s16, 2
      %s32 = sadd.s32 1, %s25
      %p33 = scmp.ge.s32.totalorder %s32, 1
      %s34 = scalar_select %p33, 0, %s32
      %s35 = sadd.s32 1, %s24
      %s36 = scalar_select %p33, %s35, %s24
      %p37 = scmp.ge.s32.totalorder %s36, 1
      %s38 = scalar_select %p37, 0, %s36
      %s39 = sadd.s32 1, %s23
      %s40 = scalar_select %p37, %s39, %s23
      %p41 = scmp.ge.s32.totalorder %s40, 2
      %s42 = scalar_select %p41, 0, %s40
      %s43 = ssub.s32 %s23, %s42
      %s44 = ssub.s32 %s25, %s34
      %s45 = sor.u32 %s43, %s44
      %s46 = ssub.s32 %s24, %s38
      %s47 = sor.u32 %s45, %s46
      %p48 = scmp.eq.s32.totalorder %s47, 0
      %s50 = sadd.s32 %s49, 1
      %s51 = scalar_select %p48, %s49, %s50
      %p54 = pneg %p48
      %p55 = scmp.eq.s32.totalorder %s16, 1
      %p56 = por %p54, %p55
      %p57 = scmp.ne.s32.totalorder %s49, %s52
      %p58 = scmp.eq.s32.totalorder %s16, 0
      %p59 = por %p57, %p58
      %p60 = scmp.ne.s32.totalorder %s49, %s52
      %p61 = scmp.eq.s32.totalorder %s21, 1
      %p62 = por %p60, %p61
      %p63 = scmp.ne.s32.totalorder %s52, %s53
      %p64 = scmp.eq.s32.totalorder %s21, 0
      %p65 = por %p63, %p64
      %p66 = scmp.ne.s32.totalorder %s52, %s53
      %p67 = scmp.eq.s32.totalorder %s22, 1
      %p68 = por %p66, %p67
      %p70 = scmp.ne.s32.totalorder %s53, %s69
      %p71 = scmp.eq.s32.totalorder %s22, 0
      %p72 = por %p70, %p71
      %s73 = ssub.s32 %s24, %s38
      %p74 = scmp.eq.s32.totalorder %s73, 0
      %s76 = sadd.s32 %s75, 1
      %s77 = scalar_select %p74, %s75, %s76
      %p80 = pneg %p74
      %p81 = scmp.eq.s32.totalorder %s16, 1
      %p82 = por %p80, %p81
      %p83 = scmp.ne.s32.totalorder %s75, %s78
      %p84 = scmp.eq.s32.totalorder %s16, 0
      %p85 = por %p83, %p84
      %p86 = scmp.ne.s32.totalorder %s75, %s78
      %p87 = scmp.eq.s32.totalorder %s21, 1
      %p88 = por %p86, %p87
      %p89 = scmp.ne.s32.totalorder %s78, %s79
      %p90 = scmp.eq.s32.totalorder %s21, 0
      %p91 = por %p89, %p90
      %p92 = scmp.ne.s32.totalorder %s78, %s79
      %p93 = scmp.eq.s32.totalorder %s22, 1
      %p94 = por %p92, %p93
      %p96 = scmp.ne.s32.totalorder %s79, %s95
      %p97 = scmp.eq.s32.totalorder %s22, 0
      %p98 = por %p96, %p97
      %s99 = ssub.s32 %s23, %s42
      %p100 = scmp.eq.s32.totalorder %s99, 0
      %s102 = sadd.s32 %s101, 1
      %s103 = scalar_select %p100, %s101, %s102
      %p106 = pneg %p100
      %p107 = scmp.eq.s32.totalorder %s16, 1
      %p108 = por %p106, %p107
      %p109 = scmp.ne.s32.totalorder %s101, %s104
      %p110 = scmp.eq.s32.totalorder %s16, 0
      %p111 = por %p109, %p110
      %p112 = scmp.ne.s32.totalorder %s101, %s104
      %p113 = scmp.eq.s32.totalorder %s21, 1
      %p114 = por %p112, %p113
      %p115 = scmp.ne.s32.totalorder %s104, %s105
      %p116 = scmp.eq.s32.totalorder %s21, 0
      %p117 = por %p115, %p116
      %p118 = scmp.ne.s32.totalorder %s104, %s105
      %p119 = scmp.eq.s32.totalorder %s22, 1
      %p120 = por %p118, %p119
      %p122 = scmp.ne.s32.totalorder %s105, %s121
      %p123 = scmp.eq.s32.totalorder %s22, 0
      %p124 = por %p122, %p123
      %s125 = ssub.s32 %s23, %s42
      %s126 = ssub.s32 %s25, %s34
      %s127 = sor.u32 %s125, %s126
      %s128 = ssub.s32 %s24, %s38
      %s129 = sor.u32 %s127, %s128
      %p130 = scmp.eq.s32.totalorder %s129, 0
      %s132 = sadd.s32 %s131, 1
      %s133 = scalar_select %p130, %s131, %s132
      %p136 = pneg %p130
      %p137 = scmp.eq.s32.totalorder %s16, 1
      %p138 = por %p136, %p137
      %p139 = scmp.ne.s32.totalorder %s131, %s134
      %p140 = scmp.eq.s32.totalorder %s16, 0
      %p141 = por %p139, %p140
      %p142 = scmp.ne.s32.totalorder %s131, %s134
      %p143 = scmp.eq.s32.totalorder %s21, 1
      %p144 = por %p142, %p143
      %p145 = scmp.ne.s32.totalorder %s134, %s135
      %p146 = scmp.eq.s32.totalorder %s21, 0
      %p147 = por %p145, %p146
      %p148 = scmp.ne.s32.totalorder %s134, %s135
      %p149 = scmp.eq.s32.totalorder %s22, 1
      %p150 = por %p148, %p149
      %p152 = scmp.ne.s32.totalorder %s135, %s151
      %p153 = scmp.eq.s32.totalorder %s22, 0
      %p154 = por %p152, %p153
      %p155 = scmp.le.s32.totalorder 1, %s16
      %p156 = scmp.lt.s32.totalorder %s16, 3
      %p157 = pnand %p155, %p156
      %p158 = pneg %p157
      // Predicated region
      $region9: #{tpu_custom_call.1} parent=5 // pred_check
        _
      $region10: #{tpu_custom_call.1} parent=5 // pred_check_branch
        %160 = sbr.rel (%p157) target = $region12
      $region11: #{tpu_custom_call.1} parent=5 // pred_region
        %s161 = ssub.s32 %s16, 1
        // Predicated region
        $region13: #{tpu_custom_call.1} parent=11 // pred_check
          %p162 = pneg %p91
        $region14: #{tpu_custom_call.1} parent=11 // pred_check_branch
          %164 = sbr.rel (%p162) target = $region16
        $region15: #{tpu_custom_call.1} parent=11 // pred_region
          %s165 = smul.u32 2, %s27
          %s167 = ssub.s32 128, 128
          %168 = vsyncadd [#allocation6], %s167
          %s169 = smul.addr %s165, 64
          %s170 = scalar_lea.hbm %s1, %s169
          %s171 = sshll.u32 [#allocation5], 4
          %s172 = int_to_ptr.vmem [resolvable:$true] %s171
          %177 = dma.hbm_to_vmem [thread:$0]  %s170, 128, %s172, [#allocation6], 64, 64, 4
        $region16: #{tpu_custom_call.1} parent=11 // pred_fallthru
          _
      $region12: #{tpu_custom_call.1} parent=5 // pred_fallthru
        _
      %p178 = scmp.lt.s32.totalorder %s16, 2
      // Predicated region
      $region17: #{tpu_custom_call.1} parent=5 // pred_check
        %p179 = pneg %p178
      $region18: #{tpu_custom_call.1} parent=5 // pred_check_branch
        %181 = sbr.rel (%p179) target = $region20
      $region19: #{tpu_custom_call.1} parent=5 // pred_region
        // Predicated region
        $region21: #{tpu_custom_call.1} parent=19 // pred_check
          %p182 = pneg %p59
        $region22: #{tpu_custom_call.1} parent=19 // pred_check_branch
          %184 = sbr.rel (%p182) target = $region24
        $region23: #{tpu_custom_call.1} parent=19 // pred_region
          %s185 = sand.u32 %s49, 1
          %s186 = scalar_lea.sflag [#allocation3], %s185
          %s187 = sand.u32 %s49, 1
          %s188 = smul.addr %s187, 32
          %s189 = scalar_lea.vmem [#allocation2], %s188
          %s190 = smul.u32 4, %s25
          %s191 = smul.u32 2, %s24
          %s193 = ssub.s32 512, 512
          %194 = vsyncadd %s186, %s193
          %s195 = smul.addr %s190, 2
          %s196 = sadd.s32 %s191, %s195
          %s197 = smul.addr %s23, 8
          %s198 = sadd.s32 %s196, %s197
          %s199 = smul.addr %s198, 64
          %s200 = scalar_lea.hbm %s0, %s199
          %s201 = sshll.u32 %s189, 4
          %s202 = int_to_ptr.vmem [resolvable:$true] %s201
          %207 = dma.hbm_to_vmem [thread:$0]  %s200, 512, %s202, %s186, 64, 64, 4
        $region24: #{tpu_custom_call.1} parent=19 // pred_fallthru
          _
        // Predicated region
        $region25: #{tpu_custom_call.1} parent=19 // pred_check
          %p208 = pneg %p111
        $region26: #{tpu_custom_call.1} parent=19 // pred_check_branch
          %210 = sbr.rel (%p208) target = $region28
        $region27: #{tpu_custom_call.1} parent=19 // pred_region
          %p211 = scmp.lt.s32.totalorder %s23, 1
          %s212 = scalar_select %p211, %s23, 1
          %s213 = scalar_lea.vmem %s2, %s212
        $region28: #{tpu_custom_call.1} parent=19 // pred_fallthru
          _
      $region20: #{tpu_custom_call.1} parent=5 // pred_fallthru
        _
      %p214 = scmp.le.s32.totalorder 1, %s16
      %p215 = scmp.lt.s32.totalorder %s16, 3
      %p216 = pnand %p214, %p215
      %p217 = pneg %p216
      // Predicated region
      $region29: #{tpu_custom_call.1} parent=5 // pred_check
        _
      $region30: #{tpu_custom_call.1} parent=5 // pred_check_branch
        %219 = sbr.rel (%p216) target = $region32
      $region31: #{tpu_custom_call.1} parent=5 // pred_region
        %s220 = ssub.s32 %s16, 1
        %s221 = sand.u32 %s52, 1
        %s222 = scalar_lea.sflag [#allocation3], %s221
        %s223 = sand.u32 %s52, 1
        %s224 = smul.addr %s223, 32
        %s225 = scalar_lea.vmem [#allocation2], %s224
        // Predicated region
        $region33: #{tpu_custom_call.1} parent=31 // pred_check
          %p226 = pneg %p65
        $region34: #{tpu_custom_call.1} parent=31 // pred_check_branch
          %228 = sbr.rel (%p226) target = $region36
        $region35: #{tpu_custom_call.1} parent=31 // pred_region
          %229 = dma.done %s222, 512
        $region36: #{tpu_custom_call.1} parent=31 // pred_fallthru
          _
        // Predicated region
        $region37: #{tpu_custom_call.1} parent=31 // pred_check
          %p230 = pneg %p91
        $region38: #{tpu_custom_call.1} parent=31 // pred_check_branch
          %232 = sbr.rel (%p230) target = $region40
        $region39: #{tpu_custom_call.1} parent=31 // pred_region
          %233 = dma.done [#allocation6], 128
        $region40: #{tpu_custom_call.1} parent=31 // pred_fallthru
          _
        %s234 = sand.u32 %s52, 1
        %s235 = scalar_lea.sflag [#allocation3], %s234
        %s236 = sand.u32 %s52, 1
        %s237 = smul.addr %s236, 32
        %s238 = scalar_lea.vmem [#allocation2], %s237
        %p239 = pneg %p65
        %p240 = pneg %p62
        %p241 = pneg %p91
        %p242 = pneg %p88
        %p243 = scmp.lt.s32.totalorder %s26, 1
        %s244 = scalar_select %p243, %s26, 1
        %s245 = scalar_lea.vmem %s2, %s244
        %p246 = pneg %p117
        %p247 = pneg %p114
        %p248 = pneg %p147
        %p249 = pneg %p144
        %s250 = sand.u32 %s134, 1
        %s251 = scalar_lea.sflag [#allocation4], %s250
        %s252 = sand.u32 %s134, 1
        %s253 = smul.addr %s252, 32
        %s254 = scalar_lea.vmem [#allocation7], %s253
        %s255 = smul.u32 4, %s28
        %s256 = smul.u32 2, %s27
        %s257 = smul.u32 2, %s27
        %p258 = scmp.lt.s32.totalorder %s26, 1
        %s259 = scalar_select %p258, %s26, 1
        %s260 = scalar_lea.vmem %s2, %s259
        %s261 = smul.u32 4, %s28
        %s262 = smul.u32 2, %s27
        %v263 = vld [vmem:[%s225] sm:$0xf]
        %v264 = vld [vmem:[%s225 + $0x4] sm:$0xf]
        %v265 = vld [vmem:[%s225 + $0x8] sm:$0xf]
        %v266 = vld [vmem:[%s225 + $0xc] sm:$0xf]
        %v267 = vld [vmem:[%s225 + $0x10] sm:$0xf]
        %v268 = vld [vmem:[%s225 + $0x14] sm:$0xf]
        %v269 = vld [vmem:[%s225 + $0x18] sm:$0xf]
        %v270 = vld [vmem:[%s225 + $0x1c] sm:$0xf]
        %v271 = vunpack.c.l.bf16 %v263
        %v272 = vunpack.c.l.bf16 %v264
        %v273 = vunpack.c.l.bf16 %v265
        %v274 = vunpack.c.l.bf16 %v266
        %v275 = vunpack.c.l.bf16 %v267
        %v276 = vunpack.c.l.bf16 %v268
        %v277 = vunpack.c.l.bf16 %v269
        %v278 = vunpack.c.l.bf16 %v270
        %v279 = vmul.f32 %v271, 0.17677669
        %v280 = vmul.f32 %v272, 0.17677669
        %v281 = vmul.f32 %v273, 0.17677669
        %v282 = vmul.f32 %v274, 0.17677669
        %v283 = vmul.f32 %v275, 0.17677669
        %v284 = vmul.f32 %v276, 0.17677669
        %v285 = vmul.f32 %v277, 0.17677669
        %v286 = vmul.f32 %v278, 0.17677669
        %v287 = vld [vmem:[#allocation5] sm:$0xf]
        %v288 = vld [vmem:[#allocation5 + $0x4] sm:$0xf]
        %v289 = vunpack.c.l.bf16 %v287
        %v290 = vunpack.c.l.bf16 %v288
        %v291 = vadd.f32 %v279, %v289
        %v292 = vadd.f32 %v280, %v290
        %v293 = vadd.f32 %v281, %v289
        %v294 = vadd.f32 %v282, %v290
        %v295 = vadd.f32 %v283, %v289
        %v296 = vadd.f32 %v284, %v290
        %v297 = vadd.f32 %v285, %v289
        %v298 = vadd.f32 %v286, %v290
        %v299 = vld [vmem:[%s260] sm:$0x1]
        %v300 = vunpack.c.l.bf16 %v299
        %v301 = vlaneseq
        %v302 = vshrl.u32 %v301, 7
        %v303 = vsub.s32 0, %v302
        %v304 = vrot.slane %v300, %v303
        %v305 = vadd.f32 %v291, %v304
        %v306 = vadd.f32 %v292, %v304
        %v307 = vadd.f32 %v293, %v304
        %v308 = vadd.f32 %v294, %v304
        %v309 = vadd.f32 %v295, %v304
        %v310 = vadd.f32 %v296, %v304
        %v311 = vadd.f32 %v297, %v304
        %v312 = vadd.f32 %v298, %v304
        %vm313 = vcmask 130048
        %v314 = vsel %vm313, %v305, -inf
        %315 = vmax.xlane.f32.xlu0 %v314
        %v316 = vpop.xlane.xlu0 %315
        %v317 = vsel %vm313, %v306, -inf
        %318 = vmax.xlane.f32.xlu0 %v317
        %v319 = vpop.xlane.xlu0 %318
        %v320 = vsel %vm313, %v307, -inf
        %321 = vmax.xlane.f32.xlu0 %v320
        %v322 = vpop.xlane.xlu0 %321
        %v323 = vsel %vm313, %v308, -inf
        %324 = vmax.xlane.f32.xlu0 %v323
        %v325 = vpop.xlane.xlu0 %324
        %v326 = vsel %vm313, %v309, -inf
        %327 = vmax.xlane.f32.xlu0 %v326
        %v328 = vpop.xlane.xlu0 %327
        %v329 = vsel %vm313, %v310, -inf
        %330 = vmax.xlane.f32.xlu0 %v329
        %v331 = vpop.xlane.xlu0 %330
        %v332 = vsel %vm313, %v311, -inf
        %333 = vmax.xlane.f32.xlu0 %v332
        %v334 = vpop.xlane.xlu0 %333
        %v335 = vsel %vm313, %v312, -inf
        %336 = vmax.xlane.f32.xlu0 %v335
        %v337 = vpop.xlane.xlu0 %336
        %v338 = vsub.f32 %v305, %v316
        %v339 = vsub.f32 %v306, %v319
        %v340 = vsub.f32 %v307, %v322
        %v341 = vsub.f32 %v308, %v325
        %v342 = vsub.f32 %v309, %v328
        %v343 = vsub.f32 %v310, %v331
        %v344 = vsub.f32 %v311, %v334
        %v345 = vsub.f32 %v312, %v337
        %v346 = vmul.f32 %v338, 1.442695
        %v347 = vpow.pop %v346
        %v348 = vmul.f32 %v339, 1.442695
        %v349 = vpow.pop %v348
        %v350 = vmul.f32 %v340, 1.442695
        %v351 = vpow.pop %v350
        %v352 = vmul.f32 %v341, 1.442695
        %v353 = vpow.pop %v352
        %v354 = vmul.f32 %v342, 1.442695
        %v355 = vpow.pop %v354
        %v356 = vmul.f32 %v343, 1.442695
        %v357 = vpow.pop %v356
        %v358 = vmul.f32 %v344, 1.442695
        %v359 = vpow.pop %v358
        %v360 = vmul.f32 %v345, 1.442695
        %v361 = vpow.pop %v360
        %v362 = vsel %vm313, %v347, 0.0
        %363 = vadd.xlane.f32.xlu0 %v362
        %v364 = vpop.xlane.xlu0 %363
        %v365 = vsel %vm313, %v349, 0.0
        %366 = vadd.xlane.f32.xlu0 %v365
        %v367 = vpop.xlane.xlu0 %366
        %v368 = vsel %vm313, %v351, 0.0
        %369 = vadd.xlane.f32.xlu0 %v368
        %v370 = vpop.xlane.xlu0 %369
        %v371 = vsel %vm313, %v353, 0.0
        %372 = vadd.xlane.f32.xlu0 %v371
        %v373 = vpop.xlane.xlu0 %372
        %v374 = vsel %vm313, %v355, 0.0
        %375 = vadd.xlane.f32.xlu0 %v374
        %v376 = vpop.xlane.xlu0 %375
        %v377 = vsel %vm313, %v357, 0.0
        %378 = vadd.xlane.f32.xlu0 %v377
        %v379 = vpop.xlane.xlu0 %378
        %v380 = vsel %vm313, %v359, 0.0
        %381 = vadd.xlane.f32.xlu0 %v380
        %v382 = vpop.xlane.xlu0 %381
        %v383 = vsel %vm313, %v361, 0.0
        %384 = vadd.xlane.f32.xlu0 %v383
        %v385 = vpop.xlane.xlu0 %384
        %v386 = vrcp.pop %v364
        %v387 = vrcp.pop %v367
        %v388 = vrcp.pop %v370
        %v389 = vrcp.pop %v373
        %v390 = vrcp.pop %v376
        %v391 = vrcp.pop %v379
        %v392 = vrcp.pop %v382
        %v393 = vrcp.pop %v385
        %v394 = vmul.f32 %v347, %v386
        %v395 = vmul.f32 %v349, %v387
        %v396 = vmul.f32 %v351, %v388
        %v397 = vmul.f32 %v353, %v389
        %v398 = vmul.f32 %v355, %v390
        %v399 = vmul.f32 %v357, %v391
        %v400 = vmul.f32 %v359, %v392
        %v401 = vmul.f32 %v361, %v393
        %v402 = vpack.c.bf16 %v395, %v394
        %v403 = vpack.c.bf16 %v397, %v396
        %v404 = vpack.c.bf16 %v399, %v398
        %v405 = vpack.c.bf16 %v401, %v400
        %v410 = vunpack.c.l.b16 %v402
        %v411 = vunpack.c.h.b16 %v402
        %v412 = vunpack.c.l.b16 %v403
        %v413 = vunpack.c.h.b16 %v403
        %v414 = vunpack.c.l.b16 %v404
        %v415 = vunpack.c.h.b16 %v404
        %v416 = vunpack.c.l.b16 %v405
        %v417 = vunpack.c.h.b16 %v405
        %v418 = vpack.c.b16 %v410, %v410
        %v419 = vpack.c.b16 %v411, %v411
        %v420 = vpack.c.b16 %v412, %v412
        %v421 = vpack.c.b16 %v413, %v413
        %v422 = vpack.c.b16 %v414, %v414
        %v423 = vpack.c.b16 %v415, %v415
        %v424 = vpack.c.b16 %v416, %v416
        %v425 = vpack.c.b16 %v417, %v417
        %vm434 = vcmask 125952
        %435 = vst.msk [vmem:[%s254] sm:$0xf] %vm434, %v418
        %436 = vst.msk [vmem:[%s254 + $0x4] sm:$0xf] %vm434, %v419
        %437 = vst.msk [vmem:[%s254 + $0x8] sm:$0xf] %vm434, %v420
        %438 = vst.msk [vmem:[%s254 + $0xc] sm:$0xf] %vm434, %v421
        %439 = vst.msk [vmem:[%s254 + $0x10] sm:$0xf] %vm434, %v422
        %440 = vst.msk [vmem:[%s254 + $0x14] sm:$0xf] %vm434, %v423
        %441 = vst.msk [vmem:[%s254 + $0x18] sm:$0xf] %vm434, %v424
        %442 = vst.msk [vmem:[%s254 + $0x1c] sm:$0xf] %vm434, %v425
        %s443 = sand.u32 %s134, 1
        %s444 = scalar_lea.sflag [#allocation4], %s443
        %s445 = sand.u32 %s134, 1
        %s446 = smul.addr %s445, 32
        %s447 = scalar_lea.vmem [#allocation7], %s446
        // Predicated region
        $region41: #{tpu_custom_call.1} parent=31 // pred_check
          %p448 = pneg %p144
        $region42: #{tpu_custom_call.1} parent=31 // pred_check_branch
          %450 = sbr.rel (%p448) target = $region44
        $region43: #{tpu_custom_call.1} parent=31 // pred_region
          %s451 = smul.u32 4, %s28
          %s452 = smul.u32 2, %s27
          %s454 = ssub.s32 512, 512
          %455 = vsyncadd %s444, %s454
          %s456 = smul.addr %s451, 2
          %s457 = sadd.s32 %s452, %s456
          %s458 = smul.addr %s26, 8
          %s459 = sadd.s32 %s457, %s458
          %s460 = smul.addr %s459, 64
          %s461 = scalar_lea.hbm %s3, %s460
          %s462 = sshll.u32 %s447, 4
          %s463 = int_to_ptr.vmem [resolvable:$true] %s462
          %468 = dma.vmem_to_hbm [thread:$0]  %s463, 512, %s461, %s444, 64, 64, 4
        $region44: #{tpu_custom_call.1} parent=31 // pred_fallthru
          _
      $region32: #{tpu_custom_call.1} parent=5 // pred_fallthru
        _
      %p469 = scmp.le.s32.totalorder 2, %s16
      // Predicated region
      $region45: #{tpu_custom_call.1} parent=5 // pred_check
        %p470 = pneg %p469
      $region46: #{tpu_custom_call.1} parent=5 // pred_check_branch
        %472 = sbr.rel (%p470) target = $region48
      $region47: #{tpu_custom_call.1} parent=5 // pred_region
        %s473 = ssub.s32 %s16, 2
        // Predicated region
        $region49: #{tpu_custom_call.1} parent=47 // pred_check
          %p474 = pneg %p150
        $region50: #{tpu_custom_call.1} parent=47 // pred_check_branch
          %476 = sbr.rel (%p474) target = $region52
        $region51: #{tpu_custom_call.1} parent=47 // pred_region
          %s477 = sand.u32 %s135, 1
          %s478 = scalar_lea.sflag [#allocation4], %s477
          %s479 = sand.u32 %s135, 1
          %s480 = smul.addr %s479, 32
          %s481 = scalar_lea.vmem [#allocation7], %s480
          %482 = dma.done %s478, 512
        $region52: #{tpu_custom_call.1} parent=47 // pred_fallthru
          _
      $region48: #{tpu_custom_call.1} parent=5 // pred_fallthru
        _
    $region6: #{tpu_custom_call.1} parent=1 // loop_footer
      %s20 = sadd.s32 1, %s16
    $region7: #{tpu_custom_call.1} parent=1 // loop_footer_branch
      %15 = sbr.rel target = $region3
    $region8: #{tpu_custom_call.1} parent=1 // loop_exit
      _
    %483 = vsyncpa [#allocation3], 1
    %s484 = scalar_lea.sflag [#allocation3], 1
    %485 = vsyncpa %s484, 1
    %486 = vsyncpa [#allocation6], 1
    %487 = vsyncpa [#allocation4], 1
    %s488 = scalar_lea.sflag [#allocation4], 1
    %489 = vsyncpa %s488, 1

</llo_original>
